<compile_context>
chip_gen: v7x
topology: tpu7x:2x2x1
jax: 0.10.0
libtpu: 0.0.40
codegen_flags: <defaults>
</compile_context>

<pallas_src>
import jax
import jax.numpy as jnp
from jax.experimental import pallas as pl
from jax.experimental.pallas import tpu as pltpu


def _linear_hardsigmoid_kernel(x_ref, wt_ref, b_ref, o_ref):
    # x_ref : (B, IN)   wt_ref : (IN, OUT)  (pre-transposed param)   b_ref : (1, OUT)
    x = x_ref[...]
    wt = wt_ref[...]
    b = b_ref[...]
    # Natural MXU contraction: x @ W^T == x @ wt (wt transposed once at init).
    acc = jnp.dot(x, wt, preferred_element_type=jnp.float32)
    # Linear bias + the module's "+3", both in-kernel (VPU slack is free here).
    acc = acc + b + 3.0
    # hardsigmoid epilogue: clip then multiply (no divide).
    o_ref[...] = (jnp.clip(acc, 0.0, 6.0) * (1.0 / 6.0)).astype(o_ref.dtype)


def linear_hardsigmoid(x, w_t, bias_2d):
    """x: (B, in_f) f32, w_t: (in_f, out_f) f32 (pre-transposed once at init),
    bias_2d: (1, out_f) f32 (reshaped once at init)."""
    B, in_f = x.shape
    out_f = w_t.shape[1]

    flops = 2 * B * in_f * out_f + 4 * B * out_f  # matmul + epilogue
    bytes_accessed = 4 * (B * in_f + in_f * out_f + out_f + B * out_f)

    return pl.pallas_call(
        _linear_hardsigmoid_kernel,
        out_shape=jax.ShapeDtypeStruct((B, out_f), jnp.float32),
        in_specs=[
            pl.BlockSpec(memory_space=pltpu.MemorySpace.VMEM),
            pl.BlockSpec(memory_space=pltpu.MemorySpace.VMEM),
            pl.BlockSpec(memory_space=pltpu.MemorySpace.VMEM),
        ],
        out_specs=pl.BlockSpec(memory_space=pltpu.MemorySpace.VMEM),
        cost_estimate=pl.CostEstimate(
            flops=flops, transcendentals=0, bytes_accessed=bytes_accessed
        ),
    )(x, w_t, bias_2d)


if __name__ == "__main__":
    key = jax.random.PRNGKey(0)
    k_x, k_w, k_b = jax.random.split(key, 3)

    # Module input: l1 = torch.randn(1, 8)
    x = jax.random.normal(k_x, (1, 8), dtype=jnp.float32)

    # Deterministic Linear(8, 8) parameters (PyTorch-style uniform init, bound = 1/sqrt(8)).
    bound = 1.0 / jnp.sqrt(8.0)
    weight = jax.random.uniform(k_w, (8, 8), jnp.float32, -bound, bound)  # (out, in) PyTorch layout
    bias = jax.random.uniform(k_b, (8,), jnp.float32, -bound, bound)

    # One-time parameter prep (off the per-call dispatch path):
    w_t = jnp.transpose(weight)          # (in, out)
    bias_2d = bias.reshape(1, -1)        # (1, out)

    out = linear_hardsigmoid(x, w_t, bias_2d)
    out = jax.block_until_ready(out)

    # Reference check in plain JAX (original PyTorch-layout math).
    ref = jnp.clip(x @ weight.T + bias + 3.0, 0.0, 6.0) / 6.0
    assert out.shape == (1, 8)
    assert jnp.allclose(out, ref, atol=1e-5), "mismatch vs reference"

    print("KERNEL_OK")
</pallas_src>

<mosaic_0001>
module attributes {stable_mosaic.version = 11 : i64} {
  func.func @_linear_hardsigmoid_kernel(%arg0: memref<1x8xf32, #tpu.memory_space<vmem>>, %arg1: memref<8x8xf32, #tpu.memory_space<vmem>>, %arg2: memref<1x8xf32, #tpu.memory_space<vmem>>, %arg3: memref<1x8xf32, #tpu.memory_space<vmem>>) attributes {dimension_semantics = [], scalar_prefetch = 0 : i64, scratch_operands = 0 : i64, tpu.core_type = #tpu.core_type<tc>} {
    %c0 = arith.constant 0 : index
    %c0_0 = arith.constant 0 : index
    %0 = vector.load %arg0[%c0, %c0_0] : memref<1x8xf32, #tpu.memory_space<vmem>>, vector<1x8xf32>
    %c0_1 = arith.constant 0 : index
    %c0_2 = arith.constant 0 : index
    %1 = vector.load %arg1[%c0_1, %c0_2] : memref<8x8xf32, #tpu.memory_space<vmem>>, vector<8x8xf32>
    %c0_3 = arith.constant 0 : index
    %c0_4 = arith.constant 0 : index
    %2 = vector.load %arg2[%c0_3, %c0_4] : memref<1x8xf32, #tpu.memory_space<vmem>>, vector<1x8xf32>
    %cst = arith.constant dense<0.000000e+00> : vector<1x8xf32>
    %3 = tpu.matmul %0, %1, %cst {dimension_numbers = #tpu.dot_dimension_numbers<[1], [0], [0], [1], [0, 0, 1, 1], [], []>} : vector<1x8xf32>, vector<8x8xf32>, vector<1x8xf32> -> vector<1x8xf32>
    %4 = arith.addf %3, %2 : vector<1x8xf32>
    %cst_5 = arith.constant 3.000000e+00 : f32
    %5 = vector.broadcast %cst_5 : f32 to vector<1x8xf32>
    %6 = arith.addf %4, %5 : vector<1x8xf32>
    %cst_6 = arith.constant 0.000000e+00 : f32
    %cst_7 = arith.constant 6.000000e+00 : f32
    %7 = vector.broadcast %cst_6 : f32 to vector<1x8xf32>
    %8 = arith.maximumf %7, %6 : vector<1x8xf32>
    %9 = vector.broadcast %cst_7 : f32 to vector<1x8xf32>
    %10 = arith.minimumf %9, %8 : vector<1x8xf32>
    %cst_8 = arith.constant 0.166666672 : f32
    %11 = vector.broadcast %cst_8 : f32 to vector<1x8xf32>
    %12 = arith.mulf %10, %11 : vector<1x8xf32>
    %c0_9 = arith.constant 0 : index
    %c0_10 = arith.constant 0 : index
    %13 = vector.load %arg3[%c0_9, %c0_10] : memref<1x8xf32, #tpu.memory_space<vmem>>, vector<1x8xf32>
    tpu.vector_store %arg3[%c0_9, %c0_10], %12 {strides = array<i32>} : memref<1x8xf32, #tpu.memory_space<vmem>>, vector<1x8xf32>,
    return
  }
}

</mosaic_0001>

<llo_original>
// kernel: tpu_custom_call.1
$region0: #{tpu_custom_call.1}
  #allocation0 [shape = 'u32[]', space=smem, size = 0x4, offset = 0x4, fixed_abs, tag = 'smem constant byte address 0x4 - core index']
  #allocation1 [shape = 'u32[144,128]{1,0:T(1,128)}', space=vmem, size = 0x12000, scoped, tag = 'internal scratch']
  %s0 = inlined_call_operand.hbm [shape: f32[1,8], index: 0, kind: input, shape index: {}]
  %s1 = inlined_call_operand.hbm [shape: f32[8,8], index: 1, kind: input, shape index: {}]
  %s2 = inlined_call_operand.vmem [shape: f32[1,8], index: 2, kind: input, shape index: {}]
  %s3 = inlined_call_operand.hbm [shape: f32[1,8], index: 3, kind: output, shape index: {}]
  %s4 = sld [smem:[#allocation0]]
  $region30: #{tpu_custom_call.1} parent=0
    _
  %s6 = ssub.s32 1, %s4
  %s7 = scalar_select 0, %s6, %s4
  $region1: #{tpu_custom_call.1} parent=0
    #allocation2 [shape = 'u8[512]{0}', space=vmem, size = 0x400, scoped, tag = 'input window, operand 0, single buffered']
    #allocation3 [shape = 's32[1]{0}', space=sflag, size = 0x4, scoped, tag = 'scoped memory for tpu_custom_call.1']
    #allocation4 [shape = 's32[1]{0}', space=sflag, size = 0x4, scoped, tag = 'scoped memory for tpu_custom_call.1']
    #allocation5 [shape = 'u8[4096]{0}', space=vmem, size = 0x1000, scoped, tag = 'input window, operand 1, single buffered']
    #allocation6 [shape = 's32[1]{0}', space=sflag, size = 0x4, scoped, tag = 'scoped memory for tpu_custom_call.1']
    #allocation7 [shape = 'u8[512]{0}', space=vmem, size = 0x400, scoped, tag = 'output window, operand 0, single buffered']
    %8 = vsyncpa [#allocation3], 0
    %9 = vsyncpa [#allocation6], 0
    %10 = vsyncpa [#allocation4], 0
    // Predicated region
    $region2: #{tpu_custom_call.1} parent=1 // pred_check
      _
    $region3: #{tpu_custom_call.1} parent=1 // pred_check_branch
      %12 = sbr.rel (0) target = $region5
    $region4: #{tpu_custom_call.1} parent=1 // pred_region
      %s14 = ssub.s32 16, 16
      %15 = vsyncadd [#allocation3], %s14
      %s17 = sshll.u32 [#allocation2], 4
      %s18 = int_to_ptr.vmem [resolvable:$true] %s17
      %20 = dma.hbm_to_vmem [thread:$0]  %s0, 16, %s18, [#allocation3]
    $region5: #{tpu_custom_call.1} parent=1 // pred_fallthru
      _
    // Predicated region
    $region6: #{tpu_custom_call.1} parent=1 // pred_check
      _
    $region7: #{tpu_custom_call.1} parent=1 // pred_check_branch
      %22 = sbr.rel (0) target = $region9
    $region8: #{tpu_custom_call.1} parent=1 // pred_region
      %s24 = ssub.s32 128, 128
      %25 = vsyncadd [#allocation6], %s24
      %s27 = sshll.u32 [#allocation5], 4
      %s28 = int_to_ptr.vmem [resolvable:$true] %s27
      %30 = dma.hbm_to_vmem [thread:$0]  %s1, 128, %s28, [#allocation6]
    $region9: #{tpu_custom_call.1} parent=1 // pred_fallthru
      _
    // Predicated region
    $region10: #{tpu_custom_call.1} parent=1 // pred_check
      _
    $region11: #{tpu_custom_call.1} parent=1 // pred_check_branch
      %32 = sbr.rel (0) target = $region13
    $region12: #{tpu_custom_call.1} parent=1 // pred_region
      _
    $region13: #{tpu_custom_call.1} parent=1 // pred_fallthru
      _
    // Predicated region
    $region14: #{tpu_custom_call.1} parent=1 // pred_check
      _
    $region15: #{tpu_custom_call.1} parent=1 // pred_check_branch
      %34 = sbr.rel (0) target = $region17
    $region16: #{tpu_custom_call.1} parent=1 // pred_region
      %35 = dma.done [#allocation3], 16
    $region17: #{tpu_custom_call.1} parent=1 // pred_fallthru
      _
    // Predicated region
    $region18: #{tpu_custom_call.1} parent=1 // pred_check
      _
    $region19: #{tpu_custom_call.1} parent=1 // pred_check_branch
      %37 = sbr.rel (0) target = $region21
    $region20: #{tpu_custom_call.1} parent=1 // pred_region
      %38 = dma.done [#allocation6], 128
    $region21: #{tpu_custom_call.1} parent=1 // pred_fallthru
      _
    %v39 = vld [vmem:[#allocation2] sm:$0x1]
    %v40 = vld [vmem:[#allocation5] sm:$0xff]
    %v41 = vld [vmem:[%s2] sm:$0x1]
    %vm42 = vcmask 64512
    %v44 = vsel %vm42, %v39, 0
    %46 = vmatprep.subr.mxu0 0.0
    %47 = vmatpush1.msra.mxu0 %v40
    %48 = vmatprep.subr.mxu0 0.0
    %49 = vmatpush1.msra.mxu0 0.0
    %50 = vmatprep.subr.mxu0 0.0
    %51 = vmatpush1.msra.mxu0 0.0
    %52 = vmatprep.subr.mxu0 0.0
    %53 = vmatpush1.msra.mxu0 0.0
    %54 = vmatprep.subr.mxu0 0.0
    %55 = vmatpush1.msra.mxu0 0.0
    %56 = vmatprep.subr.mxu0 0.0
    %57 = vmatpush1.msra.mxu0 0.0
    %58 = vmatprep.subr.mxu0 0.0
    %59 = vmatpush1.msra.mxu0 0.0
    %60 = vmatprep.subr.mxu0 0.0
    %61 = vmatpush1.msra.mxu0 0.0
    %62 = vmatprep.subr.mxu0 0.0
    %63 = vmatpush1.msra.mxu0 0.0
    %64 = vmatprep.subr.mxu0 0.0
    %65 = vmatpush1.msra.mxu0 0.0
    %66 = vmatprep.subr.mxu0 0.0
    %67 = vmatpush1.msra.mxu0 0.0
    %68 = vmatprep.subr.mxu0 0.0
    %69 = vmatpush1.msra.mxu0 0.0
    %70 = vmatprep.subr.mxu0 0.0
    %71 = vmatpush1.msra.mxu0 0.0
    %72 = vmatprep.subr.mxu0 0.0
    %73 = vmatpush1.msra.mxu0 0.0
    %74 = vmatprep.subr.mxu0 0.0
    %75 = vmatpush1.msra.mxu0 0.0
    %76 = vmatprep.subr.mxu0 0.0
    %77 = vmatpush1.msra.mxu0 0.0
    %78 = vmatprep.subr.mxu0 0.0
    %79 = vmatpush1.msra.mxu0 0.0
    %80 = vmatprep.subr.mxu0 0.0
    %81 = vmatpush1.msra.mxu0 0.0
    %82 = vmatprep.subr.mxu0 0.0
    %83 = vmatpush1.msra.mxu0 0.0
    %84 = vmatprep.subr.mxu0 0.0
    %85 = vmatpush1.msra.mxu0 0.0
    %86 = vmatprep.subr.mxu0 0.0
    %87 = vmatpush1.msra.mxu0 0.0
    %88 = vmatprep.subr.mxu0 0.0
    %89 = vmatpush1.msra.mxu0 0.0
    %90 = vmatprep.subr.mxu0 0.0
    %91 = vmatpush1.msra.mxu0 0.0
    %92 = vmatprep.subr.mxu0 0.0
    %93 = vmatpush1.msra.mxu0 0.0
    %94 = vmatprep.subr.mxu0 0.0
    %95 = vmatpush1.msra.mxu0 0.0
    %96 = vmatprep.subr.mxu0 0.0
    %97 = vmatpush1.msra.mxu0 0.0
    %98 = vmatprep.subr.mxu0 0.0
    %99 = vmatpush1.msra.mxu0 0.0
    %100 = vmatprep.subr.mxu0 0.0
    %101 = vmatpush1.msra.mxu0 0.0
    %102 = vmatprep.subr.mxu0 0.0
    %103 = vmatpush1.msra.mxu0 0.0
    %104 = vmatprep.subr.mxu0 0.0
    %105 = vmatpush1.msra.mxu0 0.0
    %106 = vmatprep.subr.mxu0 0.0
    %107 = vmatpush1.msra.mxu0 0.0
    %108 = vmatprep.subr.mxu0 0.0
    %109 = vmatpush1.msra.mxu0 0.0
    %110 = vmatprep.mubr.f32.mxu0 0.0
    %111 = vmatmul.mubr.f32.gmra.mrb[0].mxu0 %v44
    %v112 = vpop.f32.mrb[0].mxu0
    %v113 = vadd.f32 %v41, %v112
    %v114 = vpop.f32.mrb[0].mxu0
    %115 = vdwg.mxu0
    %v116 = vadd.f32 %v113, 3.0
    %v117 = vmax.f32 %v116, 0.0
    %v118 = vmin.f32 %v117, 6.0
    %v119 = vmul.f32 %v118, 0.16666667
    %vm120 = vcmask 57344
    %121 = vst.msk [vmem:[#allocation7] sm:$0x1] %vm120, %v119
    // Predicated region
    $region22: #{tpu_custom_call.1} parent=1 // pred_check
      _
    $region23: #{tpu_custom_call.1} parent=1 // pred_check_branch
      %123 = sbr.rel (0) target = $region25
    $region24: #{tpu_custom_call.1} parent=1 // pred_region
      %s125 = ssub.s32 16, 16
      %126 = vsyncadd [#allocation4], %s125
      %s128 = sshll.u32 [#allocation7], 4
      %s129 = int_to_ptr.vmem [resolvable:$true] %s128
      %131 = dma.vmem_to_hbm [thread:$0]  %s129, 16, %s3, [#allocation4]
    $region25: #{tpu_custom_call.1} parent=1 // pred_fallthru
      _
    // Predicated region
    $region26: #{tpu_custom_call.1} parent=1 // pred_check
      _
    $region27: #{tpu_custom_call.1} parent=1 // pred_check_branch
      %133 = sbr.rel (0) target = $region29
    $region28: #{tpu_custom_call.1} parent=1 // pred_region
      %134 = dma.done [#allocation4], 16
    $region29: #{tpu_custom_call.1} parent=1 // pred_fallthru
      _
    %135 = vsyncpa [#allocation3], 1
    %136 = vsyncpa [#allocation6], 1
    %137 = vsyncpa [#allocation4], 1

</llo_original>
